<compile_context>
chip_gen: v5e
topology: v5e:2x2
jax: 0.10.0
libtpu: 0.0.40
codegen_flags: <defaults>
</compile_context>

<pallas_src>
import jax
import jax.numpy as jnp
from jax import lax
from jax.experimental import pallas as pl
from jax.experimental.pallas import tpu as pltpu


def _make_kernel(K, tH, CinW, CoutWo):
    def kernel(x_ref, b_ref, o_ref):
        # x_ref: (1, 1, tH+K-1, CinW)  input row-slab (K-1 halo rows), channel*width on lanes
        # b_ref: (K, CinW, CoutWo)     folded depthwise+pointwise band weights
        # o_ref: (1, 1, tH, CoutWo)    lane-dense output slab
        acc = jnp.dot(
            x_ref[:, :, 0:tH, :].reshape(tH, CinW),
            b_ref[0, :, :],
            preferred_element_type=jnp.float32,
        )
        for kh in range(1, K):
            # Only K-1 static row-offset slab loads per tile (the kw taps and the
            # W zero-padding live inside b_ref), vs K*K unaligned slices before.
            a = x_ref[:, :, kh:kh + tH, :].reshape(tH, CinW)
            acc = acc + jnp.dot(a, b_ref[kh, :, :],
                                preferred_element_type=jnp.float32)
        o_ref[...] = acc.reshape(1, 1, tH, CoutWo).astype(o_ref.dtype)

    return kernel


def depthwise_separable_conv(x_nchw, dw_weight, pw_weight, padding, tile_h=8):
    """x_nchw: (N, Cin, H, W); dw_weight: (Cin, 1, K, K); pw_weight: (Cout, Cin, 1, 1)."""
    N, Cin, H, W = x_nchw.shape
    K = dw_weight.shape[-1]
    Cout = pw_weight.shape[0]
    P = padding
    Ho = H + 2 * P - (K - 1)
    Wo = W + 2 * P - (K - 1)

    # H tile size (must divide Ho for the simple reshape-based unpack below).
    tH = tile_h if (Ho % tile_h == 0) else Ho
    nH = Ho // tH
    tHp = tH + K - 1
    CinW = Cin * W
    CoutWo = Cout * Wo

    # ---- wrapper glue (plain JAX): layout + folded band weights ----
    # Rows as (N, H, Cin*W); pad H only (W padding is absorbed into B).
    x_rows = jnp.transpose(x_nchw, (0, 2, 1, 3)).reshape(N, H, CinW)
    x_rows = jnp.pad(x_rows, ((0, 0), (P, P), (0, 0))).astype(jnp.float32)
    # Overlapping h-tiles with a K-1 row halo (duplication fraction (K-1)/tH).
    row_ids = jnp.arange(nH)[:, None] * tH + jnp.arange(tHp)[None, :]   # (nH, tHp)
    x_tiles = x_rows[:, row_ids, :]                                     # (N, nH, tHp, CinW)

    # Folded band weights: B[kh, ci*W + w, c*Wo + x] = dw[ci, kh, w-x+P] * pw[c, ci].
    dw = dw_weight[:, 0, :, :].astype(jnp.float32)                      # (Cin, K, K)
    pw = pw_weight[:, :, 0, 0].astype(jnp.float32)                      # (Cout, Cin)
    kw_idx = jnp.arange(W)[:, None] - jnp.arange(Wo)[None, :] + P       # (W, Wo)
    in_band = (kw_idx >= 0) & (kw_idx < K)
    kw_safe = jnp.clip(kw_idx, 0, K - 1)
    dw_sel = jnp.where(in_band[None, None], dw[:, :, kw_safe], 0.0)     # (Cin, K, W, Wo)
    B = jnp.einsum('ikwx,ci->kiwcx', dw_sel, pw)                        # (K, Cin, W, Cout, Wo)
    B = B.reshape(K, CinW, CoutWo)

    kernel = _make_kernel(K, tH, CinW, CoutWo)

    flops = 2 * N * nH * K * tH * CinW * CoutWo
    bytes_accessed = 4 * (x_tiles.size + B.size + N * Ho * CoutWo)

    out_t = pl.pallas_call(
        kernel,
        out_shape=jax.ShapeDtypeStruct((N, nH, tH, CoutWo), x_nchw.dtype),
        grid_spec=pltpu.PrefetchScalarGridSpec(
            num_scalar_prefetch=0,
            grid=(N, nH),
            in_specs=[
                pl.BlockSpec((1, 1, tHp, CinW), lambda n, t: (n, t, 0, 0)),
                pl.BlockSpec((K, CinW, CoutWo), lambda n, t: (0, 0, 0)),
            ],
            out_specs=pl.BlockSpec((1, 1, tH, CoutWo), lambda n, t: (n, t, 0, 0)),
        ),
        compiler_params=pltpu.CompilerParams(
            dimension_semantics=("parallel", "parallel")),
        cost_estimate=pl.CostEstimate(
            flops=flops, transcendentals=0, bytes_accessed=bytes_accessed),
    )(x_tiles, B)

    # (N, nH, tH, Cout*Wo) -> (N, Ho, Cout, Wo) -> NCHW
    out = out_t.reshape(N, Ho, Cout, Wo)
    return jnp.transpose(out, (0, 2, 1, 3))


def _reference(x_nchw, dw_weight, pw_weight, padding):
    """Pure-JAX reference matching PyTorch Conv2d semantics."""
    Cin = x_nchw.shape[1]
    dn = lax.conv_dimension_numbers(x_nchw.shape, dw_weight.shape,
                                    ("NCHW", "OIHW", "NCHW"))
    dw_out = lax.conv_general_dilated(
        x_nchw, dw_weight, window_strides=(1, 1),
        padding=[(padding, padding), (padding, padding)],
        dimension_numbers=dn, feature_group_count=Cin)
    dn2 = lax.conv_dimension_numbers(dw_out.shape, pw_weight.shape,
                                     ("NCHW", "OIHW", "NCHW"))
    return lax.conv_general_dilated(
        dw_out, pw_weight, window_strides=(1, 1), padding=[(0, 0), (0, 0)],
        dimension_numbers=dn2)


if __name__ == "__main__":
    # Small shapes consistent with the module: batch=2, nin=4, nout=8, 16x16, K=3, P=1.
    N, Cin, Cout, H, W, K, P = 2, 4, 8, 16, 16, 3, 1

    key = jax.random.PRNGKey(0)
    kx, kdw, kpw = jax.random.split(key, 3)
    x = jax.random.normal(kx, (N, Cin, H, W), dtype=jnp.float32)
    # PyTorch weight shapes: depthwise (nin, 1, K, K), pointwise (nout, nin, 1, 1).
    dw_weight = jax.random.normal(kdw, (Cin, 1, K, K), dtype=jnp.float32) * 0.1
    pw_weight = jax.random.normal(kpw, (Cout, Cin, 1, 1), dtype=jnp.float32) * 0.1

    out = depthwise_separable_conv(x, dw_weight, pw_weight, P)
    out = jax.block_until_ready(out)

    ref = _reference(x, dw_weight, pw_weight, P)
    assert out.shape == (N, Cout, H, W), out.shape
    assert jnp.allclose(out, ref, atol=1e-4, rtol=1e-4), float(jnp.abs(out - ref).max())

    print("KERNEL_OK")
</pallas_src>

<mosaic_0001>
module attributes {stable_mosaic.version = 11 : i64} {
  func.func @kernel(%arg0: i32, %arg1: i32, %arg2: memref<1x1x10x64xf32, #tpu.memory_space<vmem>>, %arg3: memref<3x64x128xf32, #tpu.memory_space<vmem>>, %arg4: memref<1x1x8x128xf32, #tpu.memory_space<vmem>>) attributes {dimension_semantics = [#tpu.dimension_semantics<parallel>, #tpu.dimension_semantics<parallel>], iteration_bounds = array<i64: 2, 2>, scalar_prefetch = 0 : i64, scratch_operands = 0 : i64, tpu.core_type = #tpu.core_type<tc>, window_params = [{transform_indices = @transform_0, window_bounds = array<i64: 1, 1, 10, 64>}, {pipeline_mode = #tpu.pipeline_mode<synchronous>, transform_indices = @transform_1, window_bounds = array<i64: 3, 64, 128>}, {transform_indices = @transform_2, window_bounds = array<i64: 1, 1, 8, 128>}]} {
    %c0 = arith.constant 0 : index
    %c0_0 = arith.constant 0 : index
    %c0_1 = arith.constant 0 : index
    %c0_2 = arith.constant 0 : index
    %0 = vector.load %arg2[%c0, %c0_0, %c0_1, %c0_2] : memref<1x1x10x64xf32, #tpu.memory_space<vmem>>, vector<1x1x8x64xf32>
    %1 = vector.shape_cast %0 : vector<1x1x8x64xf32> to vector<8x64xf32>
    %c0_3 = arith.constant 0 : index
    %c0_4 = arith.constant 0 : index
    %c0_5 = arith.constant 0 : index
    %2 = vector.load %arg3[%c0_3, %c0_4, %c0_5] : memref<3x64x128xf32, #tpu.memory_space<vmem>>, vector<1x64x128xf32>
    %3 = vector.shape_cast %2 : vector<1x64x128xf32> to vector<64x128xf32>
    %cst = arith.constant dense<0.000000e+00> : vector<8x128xf32>
    %4 = tpu.matmul %1, %3, %cst {dimension_numbers = #tpu.dot_dimension_numbers<[1], [0], [0], [1], [0, 0, 1, 1], [], []>} : vector<8x64xf32>, vector<64x128xf32>, vector<8x128xf32> -> vector<8x128xf32>
    %c0_6 = arith.constant 0 : index
    %c0_7 = arith.constant 0 : index
    %c1 = arith.constant 1 : index
    %c0_8 = arith.constant 0 : index
    %5 = vector.load %arg2[%c0_6, %c0_7, %c1, %c0_8] : memref<1x1x10x64xf32, #tpu.memory_space<vmem>>, vector<1x1x8x64xf32>
    %6 = vector.shape_cast %5 : vector<1x1x8x64xf32> to vector<8x64xf32>
    %c1_9 = arith.constant 1 : index
    %c0_10 = arith.constant 0 : index
    %c0_11 = arith.constant 0 : index
    %7 = vector.load %arg3[%c1_9, %c0_10, %c0_11] : memref<3x64x128xf32, #tpu.memory_space<vmem>>, vector<1x64x128xf32>
    %8 = vector.shape_cast %7 : vector<1x64x128xf32> to vector<64x128xf32>
    %cst_12 = arith.constant dense<0.000000e+00> : vector<8x128xf32>
    %9 = tpu.matmul %6, %8, %cst_12 {dimension_numbers = #tpu.dot_dimension_numbers<[1], [0], [0], [1], [0, 0, 1, 1], [], []>} : vector<8x64xf32>, vector<64x128xf32>, vector<8x128xf32> -> vector<8x128xf32>
    %10 = arith.addf %4, %9 : vector<8x128xf32>
    %c0_13 = arith.constant 0 : index
    %c0_14 = arith.constant 0 : index
    %c2 = arith.constant 2 : index
    %c0_15 = arith.constant 0 : index
    %11 = vector.load %arg2[%c0_13, %c0_14, %c2, %c0_15] : memref<1x1x10x64xf32, #tpu.memory_space<vmem>>, vector<1x1x8x64xf32>
    %12 = vector.shape_cast %11 : vector<1x1x8x64xf32> to vector<8x64xf32>
    %c2_16 = arith.constant 2 : index
    %c0_17 = arith.constant 0 : index
    %c0_18 = arith.constant 0 : index
    %13 = vector.load %arg3[%c2_16, %c0_17, %c0_18] : memref<3x64x128xf32, #tpu.memory_space<vmem>>, vector<1x64x128xf32>
    %14 = vector.shape_cast %13 : vector<1x64x128xf32> to vector<64x128xf32>
    %cst_19 = arith.constant dense<0.000000e+00> : vector<8x128xf32>
    %15 = tpu.matmul %12, %14, %cst_19 {dimension_numbers = #tpu.dot_dimension_numbers<[1], [0], [0], [1], [0, 0, 1, 1], [], []>} : vector<8x64xf32>, vector<64x128xf32>, vector<8x128xf32> -> vector<8x128xf32>
    %16 = arith.addf %10, %15 : vector<8x128xf32>
    %17 = vector.shape_cast %16 : vector<8x128xf32> to vector<1x1x8x128xf32>
    %c0_20 = arith.constant 0 : index
    %c0_21 = arith.constant 0 : index
    %c0_22 = arith.constant 0 : index
    %c0_23 = arith.constant 0 : index
    %18 = vector.load %arg4[%c0_20, %c0_21, %c0_22, %c0_23] : memref<1x1x8x128xf32, #tpu.memory_space<vmem>>, vector<1x1x8x128xf32>
    tpu.vector_store %arg4[%c0_20, %c0_21, %c0_22, %c0_23], %17 {strides = array<i32>} : memref<1x1x8x128xf32, #tpu.memory_space<vmem>>, vector<1x1x8x128xf32>,
    return
  }
  func.func @transform_0(%arg0: i32, %arg1: i32) -> (i32, i32, i32, i32) {
    %c0_i32 = arith.constant 0 : i32
    %c0_i32_0 = arith.constant 0 : i32
    %c0_i32_1 = arith.constant 0 : i32
    return %arg0, %arg1, %c0_i32, %c0_i32_0 : i32, i32, i32, i32
  }
  func.func @transform_1(%arg0: i32, %arg1: i32) -> (i32, i32, i32) {
    %c0_i32 = arith.constant 0 : i32
    %c0_i32_0 = arith.constant 0 : i32
    %c0_i32_1 = arith.constant 0 : i32
    %c0_i32_2 = arith.constant 0 : i32
    return %c0_i32, %c0_i32_0, %c0_i32_1 : i32, i32, i32
  }
  func.func @transform_2(%arg0: i32, %arg1: i32) -> (i32, i32, i32, i32) {
    %c0_i32 = arith.constant 0 : i32
    %c0_i32_0 = arith.constant 0 : i32
    %c0_i32_1 = arith.constant 0 : i32
    return %arg0, %arg1, %c0_i32, %c0_i32_0 : i32, i32, i32, i32
  }
}

</mosaic_0001>

<llo_original>
// kernel: tpu_custom_call.1
$region0: #{tpu_custom_call.1}
  #allocation0 [shape = 'u32[]', space=smem, size = 0x4, offset = 0x4, fixed_abs, tag = 'smem constant byte address 0x4 - core index']
  #allocation1 [shape = 'u32[72,128]{1,0:T(1,128)}', space=vmem, size = 0x9000, scoped, tag = 'internal scratch']
  %s0 = inlined_call_operand.vmem [shape: f32[2,2,10,64], index: 0, kind: input, shape index: {}]
  %s1 = inlined_call_operand.hbm [shape: f32[3,64,128], index: 1, kind: input, shape index: {}]
  %s2 = inlined_call_operand.hbm [shape: f32[2,2,8,128], index: 2, kind: output, shape index: {}]
  %s3 = sld [smem:[#allocation0]]
  $region45: #{tpu_custom_call.1} parent=0
    _
  %s5 = ssub.s32 1, %s3
  %s6 = scalar_select 0, %s5, %s3
  $region1: #{tpu_custom_call.1} parent=0
    #allocation2 [shape = 'u8[98304]{0}', space=vmem, size = 0x18000, scoped, tag = 'input window, operand 1, single buffered']
    #allocation3 [shape = 's32[2]{0}', space=sflag, size = 0x8, scoped, tag = 'scoped memory for tpu_custom_call.1']
    #allocation4 [shape = 's32[2]{0}', space=sflag, size = 0x8, scoped, tag = 'scoped memory for tpu_custom_call.1']
    #allocation5 [shape = 'u8[8192]{0}', space=vmem, size = 0x2000, scoped, tag = 'output window, operand 0']
    %7 = vsyncpa [#allocation3], 0
    %8 = vsyncpa [#allocation4], 0
    %s9 = scalar_lea.sflag [#allocation4], 1
    %10 = vsyncpa %s9, 0
    loop: start=0, step=1, limit=6
    $region2: #{tpu_custom_call.1} parent=1 // loop_pre_header
      _
    $region3: #{tpu_custom_call.1} parent=1 // loop_header
      %s12 = sphi 0, %s16
      %p13 = scmp.ge.s32.totalorder %s12, 6
      %s19 = sphi 0, %s31
      %s20 = sphi 0, %s27
      %s21 = sphi 0, %s19
      %s22 = sphi 0, %s20
      %s23 = sphi 0, %s21
      %s24 = sphi 0, %s22
      %s36 = sphi 0, %s38
      %s39 = sphi 0, %s36
      %s40 = sphi 0, %s39
      %s56 = sphi 0, %s40
      %s60 = sphi 0, %s60
      %s62 = sphi 0, %s60
      %s63 = sphi 0, %s62
      %s77 = sphi 0, %s63
      %s85 = sphi 0, %s87
      %s88 = sphi 0, %s85
      %s89 = sphi 0, %s88
      %s105 = sphi 0, %s89
    $region4: #{tpu_custom_call.1} parent=1 // loop_header_branch
      %15 = sbr.rel (%p13) target = $region8
    $region5: #{tpu_custom_call.1} parent=1 // loop_body
      %s17 = ssub.s32 %s12, 1
      %s18 = ssub.s32 %s12, 2
      %s25 = sadd.s32 1, %s20
      %p26 = scmp.ge.s32.totalorder %s25, 2
      %s27 = scalar_select %p26, 0, %s25
      %s28 = sadd.s32 1, %s19
      %s29 = scalar_select %p26, %s28, %s19
      %p30 = scmp.ge.s32.totalorder %s29, 2
      %s31 = scalar_select %p30, 0, %s29
      %s32 = ssub.s32 %s19, %s31
      %s33 = ssub.s32 %s20, %s27
      %s34 = sor.u32 %s32, %s33
      %p35 = scmp.eq.s32.totalorder %s34, 0
      %s37 = sadd.s32 %s36, 1
      %s38 = scalar_select %p35, %s36, %s37
      %p41 = pneg %p35
      %p42 = scmp.eq.s32.totalorder %s12, 3
      %p43 = por %p41, %p42
      %p44 = scmp.ne.s32.totalorder %s36, %s39
      %p45 = scmp.eq.s32.totalorder %s12, 0
      %p46 = por %p44, %p45
      %p47 = scmp.ne.s32.totalorder %s36, %s39
      %p48 = scmp.eq.s32.totalorder %s17, 3
      %p49 = por %p47, %p48
      %p50 = scmp.ne.s32.totalorder %s39, %s40
      %p51 = scmp.eq.s32.totalorder %s17, 0
      %p52 = por %p50, %p51
      %p53 = scmp.ne.s32.totalorder %s39, %s40
      %p54 = scmp.eq.s32.totalorder %s18, 3
      %p55 = por %p53, %p54
      %p57 = scmp.ne.s32.totalorder %s40, %s56
      %p58 = scmp.eq.s32.totalorder %s18, 0
      %p59 = por %p57, %p58
      %s61 = sadd.s32 %s60, 1
      %p64 = scmp.eq.s32.totalorder %s12, 3
      %p65 = scmp.ne.s32.totalorder %s60, %s62
      %p66 = scmp.eq.s32.totalorder %s12, 0
      %p67 = por %p65, %p66
      %p68 = scmp.ne.s32.totalorder %s60, %s62
      %p69 = scmp.eq.s32.totalorder %s17, 3
      %p70 = por %p68, %p69
      %p71 = scmp.ne.s32.totalorder %s62, %s63
      %p72 = scmp.eq.s32.totalorder %s17, 0
      %p73 = por %p71, %p72
      %p74 = scmp.ne.s32.totalorder %s62, %s63
      %p75 = scmp.eq.s32.totalorder %s18, 3
      %p76 = por %p74, %p75
      %p78 = scmp.ne.s32.totalorder %s63, %s77
      %p79 = scmp.eq.s32.totalorder %s18, 0
      %p80 = por %p78, %p79
      %s81 = ssub.s32 %s19, %s31
      %s82 = ssub.s32 %s20, %s27
      %s83 = sor.u32 %s81, %s82
      %p84 = scmp.eq.s32.totalorder %s83, 0
      %s86 = sadd.s32 %s85, 1
      %s87 = scalar_select %p84, %s85, %s86
      %p90 = pneg %p84
      %p91 = scmp.eq.s32.totalorder %s12, 3
      %p92 = por %p90, %p91
      %p93 = scmp.ne.s32.totalorder %s85, %s88
      %p94 = scmp.eq.s32.totalorder %s12, 0
      %p95 = por %p93, %p94
      %p96 = scmp.ne.s32.totalorder %s85, %s88
      %p97 = scmp.eq.s32.totalorder %s17, 3
      %p98 = por %p96, %p97
      %p99 = scmp.ne.s32.totalorder %s88, %s89
      %p100 = scmp.eq.s32.totalorder %s17, 0
      %p101 = por %p99, %p100
      %p102 = scmp.ne.s32.totalorder %s88, %s89
      %p103 = scmp.eq.s32.totalorder %s18, 3
      %p104 = por %p102, %p103
      %p106 = scmp.ne.s32.totalorder %s89, %s105
      %p107 = scmp.eq.s32.totalorder %s18, 0
      %p108 = por %p106, %p107
      %p109 = scmp.le.s32.totalorder 1, %s12
      %p110 = scmp.lt.s32.totalorder %s12, 5
      %p111 = pnand %p109, %p110
      %p112 = pneg %p111
      // Predicated region
      $region9: #{tpu_custom_call.1} parent=5 // pred_check
        _
      $region10: #{tpu_custom_call.1} parent=5 // pred_check_branch
        %114 = sbr.rel (%p111) target = $region12
      $region11: #{tpu_custom_call.1} parent=5 // pred_region
        %s115 = ssub.s32 %s12, 1
        // Predicated region
        $region13: #{tpu_custom_call.1} parent=11 // pred_check
          %p116 = pneg %p73
        $region14: #{tpu_custom_call.1} parent=11 // pred_check_branch
          %118 = sbr.rel (%p116) target = $region16
        $region15: #{tpu_custom_call.1} parent=11 // pred_region
          %120 = vsyncadd [#allocation3], 0
          %s121 = sshll.u32 %s1, 4
          %s122 = int_to_ptr.hbm [resolvable:$true] %s121
          %s123 = sshll.u32 [#allocation2], 4
          %s124 = int_to_ptr.vmem [resolvable:$true] %s123
          %129 = dma.hbm_to_vmem [thread:$0]  %s122, 3072, %s124, [#allocation3], 128, 128, 8
        $region16: #{tpu_custom_call.1} parent=11 // pred_fallthru
          _
      $region12: #{tpu_custom_call.1} parent=5 // pred_fallthru
        _
      %p130 = scmp.lt.s32.totalorder %s12, 4
      // Predicated region
      $region17: #{tpu_custom_call.1} parent=5 // pred_check
        %p131 = pneg %p130
      $region18: #{tpu_custom_call.1} parent=5 // pred_check_branch
        %133 = sbr.rel (%p131) target = $region20
      $region19: #{tpu_custom_call.1} parent=5 // pred_region
        // Predicated region
        $region21: #{tpu_custom_call.1} parent=19 // pred_check
          %p134 = pneg %p46
        $region22: #{tpu_custom_call.1} parent=19 // pred_check_branch
          %136 = sbr.rel (%p134) target = $region24
        $region23: #{tpu_custom_call.1} parent=19 // pred_region
          %p137 = scmp.lt.s32.totalorder %s19, 1
          %s138 = scalar_select %p137, %s19, 1
          %p139 = scmp.lt.s32.totalorder %s20, 1
          %s140 = scalar_select %p139, %s20, 1
          %s141 = smul.addr %s140, 2
          %s142 = smul.addr %s138, 4
          %s143 = sadd.s32 %s141, %s142
          %s144 = smul.addr %s143, 8
          %s145 = scalar_lea.vmem %s0, %s144
        $region24: #{tpu_custom_call.1} parent=19 // pred_fallthru
          _
      $region20: #{tpu_custom_call.1} parent=5 // pred_fallthru
        _
      %p146 = scmp.le.s32.totalorder 1, %s12
      %p147 = scmp.lt.s32.totalorder %s12, 5
      %p148 = pnand %p146, %p147
      %p149 = pneg %p148
      // Predicated region
      $region25: #{tpu_custom_call.1} parent=5 // pred_check
        _
      $region26: #{tpu_custom_call.1} parent=5 // pred_check_branch
        %151 = sbr.rel (%p148) target = $region28
      $region27: #{tpu_custom_call.1} parent=5 // pred_region
        %s152 = ssub.s32 %s12, 1
        // Predicated region
        $region29: #{tpu_custom_call.1} parent=27 // pred_check
          %p153 = pneg %p73
        $region30: #{tpu_custom_call.1} parent=27 // pred_check_branch
          %155 = sbr.rel (%p153) target = $region32
        $region31: #{tpu_custom_call.1} parent=27 // pred_region
          %157 = dma.done [#allocation3], 3072
        $region32: #{tpu_custom_call.1} parent=27 // pred_fallthru
          _
        %p158 = scmp.lt.s32.totalorder %s21, 1
        %s159 = scalar_select %p158, %s21, 1
        %p160 = scmp.lt.s32.totalorder %s22, 1
        %s161 = scalar_select %p160, %s22, 1
        %s162 = smul.addr %s161, 2
        %s163 = smul.addr %s159, 4
        %s164 = sadd.s32 %s162, %s163
        %s165 = smul.addr %s164, 8
        %s166 = scalar_lea.vmem %s0, %s165
        %p167 = pneg %p52
        %p168 = pneg %p49
        %p169 = pneg %p73
        %p170 = pneg %p70
        %p171 = pneg %p101
        %p172 = pneg %p98
        %s173 = sand.u32 %s88, 1
        %s174 = scalar_lea.sflag [#allocation4], %s173
        %s175 = sand.u32 %s88, 1
        %s176 = smul.addr %s175, 8
        %s177 = scalar_lea.vmem [#allocation5], %s176
        %p178 = scmp.lt.s32.totalorder %s21, 1
        %s179 = scalar_select %p178, %s21, 1
        %p180 = scmp.lt.s32.totalorder %s22, 1
        %s181 = scalar_select %p180, %s22, 1
        %s182 = smul.addr %s181, 2
        %s183 = smul.addr %s179, 4
        %s184 = sadd.s32 %s182, %s183
        %s185 = smul.addr %s184, 8
        %s186 = scalar_lea.vmem %s0, %s185
        %v187 = vld [vmem:[%s186] sm:$0xff]
        %v188 = vld [vmem:[#allocation2] sm:$0xff]
        %v189 = vld [vmem:[#allocation2 + $0x8] sm:$0xff]
        %v190 = vld [vmem:[#allocation2 + $0x10] sm:$0xff]
        %v191 = vld [vmem:[#allocation2 + $0x18] sm:$0xff]
        %v192 = vld [vmem:[#allocation2 + $0x20] sm:$0xff]
        %v193 = vld [vmem:[#allocation2 + $0x28] sm:$0xff]
        %v194 = vld [vmem:[#allocation2 + $0x30] sm:$0xff]
        %v195 = vld [vmem:[#allocation2 + $0x38] sm:$0xff]
        %v196 = vld [vmem:[%s186 + $0x1] sm:$0xff]
        %s197 = scalar_lea.vmem [#allocation2], 64
        %v198 = vld [vmem:[%s197] sm:$0xff]
        %v199 = vld [vmem:[%s197 + $0x8] sm:$0xff]
        %v200 = vld [vmem:[%s197 + $0x10] sm:$0xff]
        %v201 = vld [vmem:[%s197 + $0x18] sm:$0xff]
        %v202 = vld [vmem:[%s197 + $0x20] sm:$0xff]
        %v203 = vld [vmem:[%s197 + $0x28] sm:$0xff]
        %v204 = vld [vmem:[%s197 + $0x30] sm:$0xff]
        %v205 = vld [vmem:[%s197 + $0x38] sm:$0xff]
        %vm206 = vcmask 523264
        %v208 = vsel %vm206, %v196, 0
        %210 = vmatpush.msra.mxu0 0.0
        %211 = vmatpush.msra.mxu0 0.0
        %212 = vmatpush.msra.mxu0 0.0
        %213 = vmatpush.msra.mxu0 0.0
        %214 = vmatpush.msra.mxu0 0.0
        %215 = vmatpush.msra.mxu0 0.0
        %216 = vmatpush.msra.mxu0 0.0
        %217 = vmatpush.msra.mxu0 0.0
        %218 = vmatpush.msra.mxu0 %v205
        %219 = vmatpush.msra.mxu0 %v204
        %220 = vmatpush.msra.mxu0 %v203
        %221 = vmatpush.msra.mxu0 %v202
        %222 = vmatpush.msra.mxu0 %v201
        %223 = vmatpush.msra.mxu0 %v200
        %224 = vmatpush.msra.mxu0 %v199
        %225 = vmatpush.msra.mxu0 %v198
        %226 = vmatmul.f32.gmra.mxu0 %v208
        %v227 = vpop.f32.mrf.mxu0
        %v228 = vadd.f32 0.0, %v227
        %229 = vdwg.mxu0
        %v231 = vsel %vm206, %v187, 0
        %233 = vmatpush.msra.mxu0 0.0
        %234 = vmatpush.msra.mxu0 0.0
        %235 = vmatpush.msra.mxu0 0.0
        %236 = vmatpush.msra.mxu0 0.0
        %237 = vmatpush.msra.mxu0 0.0
        %238 = vmatpush.msra.mxu0 0.0
        %239 = vmatpush.msra.mxu0 0.0
        %240 = vmatpush.msra.mxu0 0.0
        %241 = vmatpush.msra.mxu0 %v195
        %242 = vmatpush.msra.mxu0 %v194
        %243 = vmatpush.msra.mxu0 %v193
        %244 = vmatpush.msra.mxu0 %v192
        %245 = vmatpush.msra.mxu0 %v191
        %246 = vmatpush.msra.mxu0 %v190
        %247 = vmatpush.msra.mxu0 %v189
        %248 = vmatpush.msra.mxu0 %v188
        %249 = vmatmul.f32.gmra.mxu0 %v231
        %v250 = vpop.f32.mrf.mxu0
        %v251 = vadd.f32 %v228, %v250
        %252 = vdwg.mxu0
        %v253 = vld [vmem:[%s186 + $0x2] sm:$0xff]
        %s254 = scalar_lea.vmem [#allocation2], 128
        %v255 = vld [vmem:[%s254] sm:$0xff]
        %v256 = vld [vmem:[%s254 + $0x8] sm:$0xff]
        %v257 = vld [vmem:[%s254 + $0x10] sm:$0xff]
        %v258 = vld [vmem:[%s254 + $0x18] sm:$0xff]
        %v259 = vld [vmem:[%s254 + $0x20] sm:$0xff]
        %v260 = vld [vmem:[%s254 + $0x28] sm:$0xff]
        %v261 = vld [vmem:[%s254 + $0x30] sm:$0xff]
        %v262 = vld [vmem:[%s254 + $0x38] sm:$0xff]
        %v264 = vsel %vm206, %v253, 0
        %266 = vmatpush.msra.mxu0 0.0
        %267 = vmatpush.msra.mxu0 0.0
        %268 = vmatpush.msra.mxu0 0.0
        %269 = vmatpush.msra.mxu0 0.0
        %270 = vmatpush.msra.mxu0 0.0
        %271 = vmatpush.msra.mxu0 0.0
        %272 = vmatpush.msra.mxu0 0.0
        %273 = vmatpush.msra.mxu0 0.0
        %274 = vmatpush.msra.mxu0 %v262
        %275 = vmatpush.msra.mxu0 %v261
        %276 = vmatpush.msra.mxu0 %v260
        %277 = vmatpush.msra.mxu0 %v259
        %278 = vmatpush.msra.mxu0 %v258
        %279 = vmatpush.msra.mxu0 %v257
        %280 = vmatpush.msra.mxu0 %v256
        %281 = vmatpush.msra.mxu0 %v255
        %282 = vmatmul.f32.gmra.mxu0 %v264
        %v283 = vpop.f32.mrf.mxu0
        %v284 = vadd.f32 0.0, %v283
        %285 = vdwg.mxu0
        %v286 = vadd.f32 %v251, %v284
        %287 = vst [vmem:[%s177] sm:$0xff] %v286
        %s288 = sand.u32 %s88, 1
        %s289 = scalar_lea.sflag [#allocation4], %s288
        %s290 = sand.u32 %s88, 1
        %s291 = smul.addr %s290, 8
        %s292 = scalar_lea.vmem [#allocation5], %s291
        // Predicated region
        $region33: #{tpu_custom_call.1} parent=27 // pred_check
          %p293 = pneg %p98
        $region34: #{tpu_custom_call.1} parent=27 // pred_check_branch
          %295 = sbr.rel (%p293) target = $region36
        $region35: #{tpu_custom_call.1} parent=27 // pred_region
          %297 = vsyncadd %s289, 0
          %s298 = smul.addr %s21, 2
          %s299 = sadd.s32 %s22, %s298
          %s300 = smul.addr %s299, 8
          %s301 = scalar_lea.hbm %s2, %s300
          %s303 = sshll.u32 %s292, 4
          %s304 = int_to_ptr.vmem [resolvable:$true] %s303
          %s305 = sshll.u32 %s301, 4
          %s306 = int_to_ptr.hbm [resolvable:$true] %s305
          %308 = dma.vmem_to_hbm [thread:$0]  %s304, 128, %s306, %s289
        $region36: #{tpu_custom_call.1} parent=27 // pred_fallthru
          _
      $region28: #{tpu_custom_call.1} parent=5 // pred_fallthru
        _
      %p309 = scmp.le.s32.totalorder 2, %s12
      // Predicated region
      $region37: #{tpu_custom_call.1} parent=5 // pred_check
        %p310 = pneg %p309
      $region38: #{tpu_custom_call.1} parent=5 // pred_check_branch
        %312 = sbr.rel (%p310) target = $region40
      $region39: #{tpu_custom_call.1} parent=5 // pred_region
        %s313 = ssub.s32 %s12, 2
        // Predicated region
        $region41: #{tpu_custom_call.1} parent=39 // pred_check
          %p314 = pneg %p104
        $region42: #{tpu_custom_call.1} parent=39 // pred_check_branch
          %316 = sbr.rel (%p314) target = $region44
        $region43: #{tpu_custom_call.1} parent=39 // pred_region
          %s317 = sand.u32 %s89, 1
          %s318 = scalar_lea.sflag [#allocation4], %s317
          %s319 = sand.u32 %s89, 1
          %s320 = smul.addr %s319, 8
          %s321 = scalar_lea.vmem [#allocation5], %s320
          %323 = dma.done %s318, 128
        $region44: #{tpu_custom_call.1} parent=39 // pred_fallthru
          _
      $region40: #{tpu_custom_call.1} parent=5 // pred_fallthru
        _
    $region6: #{tpu_custom_call.1} parent=1 // loop_footer
      %s16 = sadd.s32 1, %s12
    $region7: #{tpu_custom_call.1} parent=1 // loop_footer_branch
      %11 = sbr.rel target = $region3
    $region8: #{tpu_custom_call.1} parent=1 // loop_exit
      _
    %324 = vsyncpa [#allocation3], 1
    %s325 = scalar_lea.sflag [#allocation3], 1
    %326 = vsyncpa %s325, 1
    %327 = vsyncpa [#allocation4], 1
    %s328 = scalar_lea.sflag [#allocation4], 1
    %329 = vsyncpa %s328, 1

</llo_original>
